<compile_context>
chip_gen: v6e
topology: v6e:2x2x1
jax: 0.10.0
libtpu: 0.0.40
codegen_flags: <defaults>
</compile_context>

<pallas_src>
import functools

import numpy as np
import jax
import jax.numpy as jnp
from jax.experimental import pallas as pl
from jax.experimental.pallas import tpu as pltpu

_LANES = 128
_SUBLANES = 8
_MAX_ROW_BLOCK = 2048          # 2048*128*4B = 1 MiB per buffer (~4 MiB double-buffered)


# ----------------------------------------------------------------------------- kernel
def _gain_kernel(xi_ref, x_ref, o_ref):
    # xi_ref: (1,) scalar gain in SMEM.  x_ref / o_ref: (row_blk, 128) VMEM tiles.
    o_ref[...] = x_ref[...] * xi_ref[0]


@functools.partial(jax.jit, static_argnames=("row_blk",))
def _apply_gain_2d(x2d, xi, *, row_blk):
    rows, lanes = x2d.shape
    grid = (pl.cdiv(rows, row_blk),)
    return pl.pallas_call(
        _gain_kernel,
        out_shape=jax.ShapeDtypeStruct((rows, lanes), x2d.dtype),
        grid=grid,
        in_specs=[
            pl.BlockSpec(memory_space=pltpu.MemorySpace.SMEM),       # xi scalar
            pl.BlockSpec((row_blk, lanes), lambda i: (i, 0)),        # input slab
        ],
        out_specs=pl.BlockSpec((row_blk, lanes), lambda i: (i, 0)),
        compiler_params=pltpu.CompilerParams(
            dimension_semantics=("parallel",)),
    )(xi, x2d)


# ------------------------------------------------------------------------------- glue
def _pick_row_block(rows):
    """Largest sane block that is a multiple of 8 and keeps >= 2 grid steps when
    there is enough work (v7x has 2 TensorCores)."""
    if rows <= _SUBLANES:
        return rows
    half = (rows // 2) // _SUBLANES * _SUBLANES
    return max(_SUBLANES, min(_MAX_ROW_BLOCK, half))


def apply_gain(x, xi):
    """y = x * xi through the Pallas kernel, for any input shape (f32 path)."""
    x = jnp.asarray(x, jnp.float32)
    total = x.size
    chunk = _SUBLANES * _LANES
    pad = (-total) % chunk
    flat = x.reshape(-1)
    if pad:
        flat = jnp.pad(flat, (0, pad))
    x2d = flat.reshape(-1, _LANES)                   # rows is a multiple of 8
    row_blk = _pick_row_block(x2d.shape[0])
    xi_arr = jnp.asarray([xi], jnp.float32)
    y2d = _apply_gain_2d(x2d, xi_arr, row_blk=row_blk)
    return y2d.reshape(-1)[:total].reshape(x.shape)


class RandomGainOffset:
    """JAX/Pallas port of the PyTorch RandomGainOffset augmentation."""

    def __init__(self, p=0.5, xi_rgo=0.1, seed=0):
        self.p = float(p)
        self.xi_rgo = float(xi_rgo)
        self._rng = np.random.default_rng(seed)      # host RNG: no device sync per gate
        self.last_xi = None                          # gain applied on the last call (or None)

    def __call__(self, x):
        # torch.rand(1) < p gate, done on the host at trace time.
        if self._rng.random() < self.p:
            xi = 1.0 + (self._rng.random() - 0.5) * 2.0 * self.xi_rgo
            self.last_xi = float(xi)
            return apply_gain(x, xi)
        self.last_xi = None
        return jnp.asarray(x, jnp.float32)           # identity path: no kernel launch


# ------------------------------------------------------------------------------- main
if __name__ == "__main__":
    key = jax.random.PRNGKey(0)
    k1, k2 = jax.random.split(key)

    # 1) p = 1.0 -> gain always applied; check against plain JAX reference.
    x = jax.random.normal(k1, (2, 4, 16, 32), jnp.float32)
    mod = RandomGainOffset(p=1.0, xi_rgo=0.1, seed=123)
    y = jax.block_until_ready(mod(x))
    assert y.shape == x.shape, y.shape
    assert mod.last_xi is not None
    ref = x * jnp.float32(mod.last_xi)
    assert bool(jnp.allclose(y, ref, atol=1e-6, rtol=1e-6))

    # Exercise the ragged / padded path (total elements not a multiple of 8*128).
    x_odd = jax.random.normal(k2, (2, 3, 16, 36), jnp.float32)
    y_odd = jax.block_until_ready(apply_gain(x_odd, 1.07))
    assert y_odd.shape == x_odd.shape
    assert bool(jnp.allclose(y_odd, x_odd * jnp.float32(1.07), atol=1e-6, rtol=1e-6))

    # 2) p = 0.0 -> identity, no kernel launch (matches torch semantics exactly).
    mod_off = RandomGainOffset(p=0.0, xi_rgo=0.1, seed=7)
    y_id = jax.block_until_ready(mod_off(x))
    assert bool(jnp.array_equal(y_id, x))

    print("KERNEL_OK")
</pallas_src>

<mosaic_0001>
module attributes {stable_mosaic.version = 11 : i64} {
  func.func @_gain_kernel(%arg0: i32, %arg1: memref<1xf32, #tpu.memory_space<smem>>, %arg2: memref<16x128xf32, #tpu.memory_space<vmem>>, %arg3: memref<16x128xf32, #tpu.memory_space<vmem>>) attributes {dimension_semantics = [#tpu.dimension_semantics<parallel>], iteration_bounds = array<i64: 2>, scalar_prefetch = 0 : i64, scratch_operands = 0 : i64, tpu.core_type = #tpu.core_type<tc>, window_params = [{transform_indices = @transform_0, window_bounds = array<i64: 1>}, {transform_indices = @transform_1, window_bounds = array<i64: 16, 128>}, {transform_indices = @transform_2, window_bounds = array<i64: 16, 128>}]} {
    %c0 = arith.constant 0 : index
    %c0_0 = arith.constant 0 : index
    %0 = vector.load %arg2[%c0, %c0_0] : memref<16x128xf32, #tpu.memory_space<vmem>>, vector<16x128xf32>
    %c0_1 = arith.constant 0 : index
    %1 = memref.load %arg1[%c0_1] : memref<1xf32, #tpu.memory_space<smem>>
    %2 = vector.broadcast %1 : f32 to vector<16x128xf32>
    %3 = arith.mulf %0, %2 : vector<16x128xf32>
    %c0_2 = arith.constant 0 : index
    %c0_3 = arith.constant 0 : index
    %4 = vector.load %arg3[%c0_2, %c0_3] : memref<16x128xf32, #tpu.memory_space<vmem>>, vector<16x128xf32>
    tpu.vector_store %arg3[%c0_2, %c0_3], %3 {strides = array<i32>} : memref<16x128xf32, #tpu.memory_space<vmem>>, vector<16x128xf32>,
    return
  }
  func.func @transform_0(%arg0: i32) -> i32 {
    %c0_i32 = arith.constant 0 : i32
    %c0_i32_0 = arith.constant 0 : i32
    return %c0_i32 : i32
  }
  func.func @transform_1(%arg0: i32) -> (i32, i32) {
    %c0_i32 = arith.constant 0 : i32
    %c0_i32_0 = arith.constant 0 : i32
    return %arg0, %c0_i32 : i32, i32
  }
  func.func @transform_2(%arg0: i32) -> (i32, i32) {
    %c0_i32 = arith.constant 0 : i32
    %c0_i32_0 = arith.constant 0 : i32
    return %arg0, %c0_i32 : i32, i32
  }
}

</mosaic_0001>

<llo_original>
// kernel: _apply_gain_2d.1
$region0: #{_apply_gain_2d.1}
  #allocation0 [shape = 'u32[]', space=smem, size = 0x4, offset = 0x4, fixed_abs, tag = 'smem constant byte address 0x4 - core index']
  #allocation1 [shape = 'u32[144,128]{1,0:T(1,128)}', space=vmem, size = 0x12000, scoped, tag = 'internal scratch']
  #allocation2 [shape = 'f32[1]{0:T(128)S(6)}', space=smem, size = 0x200, scoped, tag = 'scoped memory for _apply_gain_2d.1']
  %s0 = inlined_call_operand.<no memory space> [shape: f32[1], index: 0, kind: input, shape index: {}]
  %s1 = inlined_call_operand.hbm [shape: f32[32,128], index: 1, kind: input, shape index: {}]
  %s2 = inlined_call_operand.hbm [shape: f32[32,128], index: 2, kind: output, shape index: {}]
  %s3 = sld [smem:[#allocation0]]
  $region45: #{_apply_gain_2d.1} parent=0
    _
  %s5 = ssub.s32 1, %s3
  %s6 = scalar_select 0, %s5, %s3
  %7 = sst [smem:[#allocation2]] %s0
  $region1: #{_apply_gain_2d.1} parent=0
    #allocation3 [shape = 'u8[16384]{0}', space=vmem, size = 0x4000, scoped, tag = 'input window, operand 1']
    #allocation4 [shape = 's32[2]{0}', space=sflag, size = 0x8, scoped, tag = 'scoped memory for _apply_gain_2d.1']
    #allocation5 [shape = 's32[2]{0}', space=sflag, size = 0x8, scoped, tag = 'scoped memory for _apply_gain_2d.1']
    #allocation6 [shape = 'u8[16384]{0}', space=vmem, size = 0x4000, scoped, tag = 'output window, operand 0']
    %8 = vsyncpa [#allocation4], 0
    %s9 = scalar_lea.sflag [#allocation4], 1
    %10 = vsyncpa %s9, 0
    %11 = vsyncpa [#allocation5], 0
    %s12 = scalar_lea.sflag [#allocation5], 1
    %13 = vsyncpa %s12, 0
    loop: start=0, step=1, limit=4
    $region2: #{_apply_gain_2d.1} parent=1 // loop_pre_header
      _
    $region3: #{_apply_gain_2d.1} parent=1 // loop_header
      %s15 = sphi 0, %s19
      %p16 = scmp.ge.s32.totalorder %s15, 4
      %s23 = sphi 0, %s23
      %s25 = sphi 0, %s23
      %s26 = sphi 0, %s25
      %s40 = sphi 0, %s26
      %s46 = sphi 0, %s48
      %s49 = sphi 0, %s46
      %s50 = sphi 0, %s49
      %s66 = sphi 0, %s50
      %s72 = sphi 0, %s74
      %s75 = sphi 0, %s72
      %s76 = sphi 0, %s75
      %s92 = sphi 0, %s76
    $region4: #{_apply_gain_2d.1} parent=1 // loop_header_branch
      %18 = sbr.rel (%p16) target = $region8
    $region5: #{_apply_gain_2d.1} parent=1 // loop_body
      %s20 = ssub.s32 %s15, 1
      %s21 = ssub.s32 %s15, 2
      %s22 = sadd.s32 %s15, 1
      %s24 = sadd.s32 %s23, 1
      %p27 = scmp.eq.s32.totalorder %s15, 1
      %p28 = scmp.ne.s32.totalorder %s23, %s25
      %p29 = scmp.eq.s32.totalorder %s15, 0
      %p30 = por %p28, %p29
      %p31 = scmp.ne.s32.totalorder %s23, %s25
      %p32 = scmp.eq.s32.totalorder %s20, 1
      %p33 = por %p31, %p32
      %p34 = scmp.ne.s32.totalorder %s25, %s26
      %p35 = scmp.eq.s32.totalorder %s20, 0
      %p36 = por %p34, %p35
      %p37 = scmp.ne.s32.totalorder %s25, %s26
      %p38 = scmp.eq.s32.totalorder %s21, 1
      %p39 = por %p37, %p38
      %p41 = scmp.ne.s32.totalorder %s26, %s40
      %p42 = scmp.eq.s32.totalorder %s21, 0
      %p43 = por %p41, %p42
      %s44 = ssub.s32 %s15, %s22
      %p45 = scmp.eq.s32.totalorder %s44, 0
      %s47 = sadd.s32 %s46, 1
      %s48 = scalar_select %p45, %s46, %s47
      %p51 = pneg %p45
      %p52 = scmp.eq.s32.totalorder %s15, 1
      %p53 = por %p51, %p52
      %p54 = scmp.ne.s32.totalorder %s46, %s49
      %p55 = scmp.eq.s32.totalorder %s15, 0
      %p56 = por %p54, %p55
      %p57 = scmp.ne.s32.totalorder %s46, %s49
      %p58 = scmp.eq.s32.totalorder %s20, 1
      %p59 = por %p57, %p58
      %p60 = scmp.ne.s32.totalorder %s49, %s50
      %p61 = scmp.eq.s32.totalorder %s20, 0
      %p62 = por %p60, %p61
      %p63 = scmp.ne.s32.totalorder %s49, %s50
      %p64 = scmp.eq.s32.totalorder %s21, 1
      %p65 = por %p63, %p64
      %p67 = scmp.ne.s32.totalorder %s50, %s66
      %p68 = scmp.eq.s32.totalorder %s21, 0
      %p69 = por %p67, %p68
      %s70 = ssub.s32 %s15, %s22
      %p71 = scmp.eq.s32.totalorder %s70, 0
      %s73 = sadd.s32 %s72, 1
      %s74 = scalar_select %p71, %s72, %s73
      %p77 = pneg %p71
      %p78 = scmp.eq.s32.totalorder %s15, 1
      %p79 = por %p77, %p78
      %p80 = scmp.ne.s32.totalorder %s72, %s75
      %p81 = scmp.eq.s32.totalorder %s15, 0
      %p82 = por %p80, %p81
      %p83 = scmp.ne.s32.totalorder %s72, %s75
      %p84 = scmp.eq.s32.totalorder %s20, 1
      %p85 = por %p83, %p84
      %p86 = scmp.ne.s32.totalorder %s75, %s76
      %p87 = scmp.eq.s32.totalorder %s20, 0
      %p88 = por %p86, %p87
      %p89 = scmp.ne.s32.totalorder %s75, %s76
      %p90 = scmp.eq.s32.totalorder %s21, 1
      %p91 = por %p89, %p90
      %p93 = scmp.ne.s32.totalorder %s76, %s92
      %p94 = scmp.eq.s32.totalorder %s21, 0
      %p95 = por %p93, %p94
      %p96 = scmp.le.s32.totalorder 1, %s15
      %p97 = scmp.lt.s32.totalorder %s15, 3
      %p98 = pnand %p96, %p97
      %p99 = pneg %p98
      // Predicated region
      $region9: #{_apply_gain_2d.1} parent=5 // pred_check
        _
      $region10: #{_apply_gain_2d.1} parent=5 // pred_check_branch
        %101 = sbr.rel (%p98) target = $region12
      $region11: #{_apply_gain_2d.1} parent=5 // pred_region
        %s102 = ssub.s32 %s15, 1
        // Predicated region
        $region13: #{_apply_gain_2d.1} parent=11 // pred_check
          %p103 = pneg %p36
        $region14: #{_apply_gain_2d.1} parent=11 // pred_check_branch
          %105 = sbr.rel (%p103) target = $region16
        $region15: #{_apply_gain_2d.1} parent=11 // pred_region
          _
        $region16: #{_apply_gain_2d.1} parent=11 // pred_fallthru
          _
      $region12: #{_apply_gain_2d.1} parent=5 // pred_fallthru
        _
      %p106 = scmp.lt.s32.totalorder %s15, 2
      // Predicated region
      $region17: #{_apply_gain_2d.1} parent=5 // pred_check
        %p107 = pneg %p106
      $region18: #{_apply_gain_2d.1} parent=5 // pred_check_branch
        %109 = sbr.rel (%p107) target = $region20
      $region19: #{_apply_gain_2d.1} parent=5 // pred_region
        // Predicated region
        $region21: #{_apply_gain_2d.1} parent=19 // pred_check
          %p110 = pneg %p56
        $region22: #{_apply_gain_2d.1} parent=19 // pred_check_branch
          %112 = sbr.rel (%p110) target = $region24
        $region23: #{_apply_gain_2d.1} parent=19 // pred_region
          %s113 = sand.u32 %s46, 1
          %s114 = scalar_lea.sflag [#allocation4], %s113
          %s115 = sand.u32 %s46, 1
          %s116 = smul.addr %s115, 16
          %s117 = scalar_lea.vmem [#allocation3], %s116
          %s118 = smul.u32 2, %s15
          %s120 = ssub.s32 256, 256
          %121 = vsyncadd %s114, %s120
          %s122 = smul.addr %s118, 128
          %s123 = scalar_lea.hbm %s1, %s122
          %s124 = sshll.u32 %s117, 4
          %s125 = int_to_ptr.vmem [resolvable:$true] %s124
          %130 = dma.hbm_to_vmem [thread:$0]  %s123, 256, %s125, %s114, 128, 128, 8
        $region24: #{_apply_gain_2d.1} parent=19 // pred_fallthru
          _
      $region20: #{_apply_gain_2d.1} parent=5 // pred_fallthru
        _
      %p131 = scmp.le.s32.totalorder 1, %s15
      %p132 = scmp.lt.s32.totalorder %s15, 3
      %p133 = pnand %p131, %p132
      %p134 = pneg %p133
      // Predicated region
      $region25: #{_apply_gain_2d.1} parent=5 // pred_check
        _
      $region26: #{_apply_gain_2d.1} parent=5 // pred_check_branch
        %136 = sbr.rel (%p133) target = $region28
      $region27: #{_apply_gain_2d.1} parent=5 // pred_region
        %s137 = ssub.s32 %s15, 1
        %s138 = sand.u32 %s49, 1
        %s139 = scalar_lea.sflag [#allocation4], %s138
        %s140 = sand.u32 %s49, 1
        %s141 = smul.addr %s140, 16
        %s142 = scalar_lea.vmem [#allocation3], %s141
        // Predicated region
        $region29: #{_apply_gain_2d.1} parent=27 // pred_check
          %p143 = pneg %p62
        $region30: #{_apply_gain_2d.1} parent=27 // pred_check_branch
          %145 = sbr.rel (%p143) target = $region32
        $region31: #{_apply_gain_2d.1} parent=27 // pred_region
          %146 = dma.done %s139, 256
        $region32: #{_apply_gain_2d.1} parent=27 // pred_fallthru
          _
        %p147 = pneg %p36
        %p148 = pneg %p33
        %s149 = sand.u32 %s49, 1
        %s150 = scalar_lea.sflag [#allocation4], %s149
        %s151 = sand.u32 %s49, 1
        %s152 = smul.addr %s151, 16
        %s153 = scalar_lea.vmem [#allocation3], %s152
        %p154 = pneg %p62
        %p155 = pneg %p59
        %p156 = pneg %p88
        %p157 = pneg %p85
        %s158 = sand.u32 %s75, 1
        %s159 = scalar_lea.sflag [#allocation5], %s158
        %s160 = sand.u32 %s75, 1
        %s161 = smul.addr %s160, 16
        %s162 = scalar_lea.vmem [#allocation6], %s161
        %s163 = smul.u32 2, %s20
        %s164 = smul.u32 2, %s20
        %v165 = vld [vmem:[%s142] sm:$0xff]
        %v166 = vld [vmem:[%s142 + $0x8] sm:$0xff]
        %s167 = sld [smem:[#allocation2]]
        %v168 = vstv %s167
        %v169 = vmul.f32 %v165, %v168
        %v170 = vmul.f32 %v166, %v168
        %171 = vst [vmem:[%s162] sm:$0xff] %v169
        %172 = vst [vmem:[%s162 + $0x8] sm:$0xff] %v170
        %s173 = sand.u32 %s75, 1
        %s174 = scalar_lea.sflag [#allocation5], %s173
        %s175 = sand.u32 %s75, 1
        %s176 = smul.addr %s175, 16
        %s177 = scalar_lea.vmem [#allocation6], %s176
        // Predicated region
        $region33: #{_apply_gain_2d.1} parent=27 // pred_check
          %p178 = pneg %p85
        $region34: #{_apply_gain_2d.1} parent=27 // pred_check_branch
          %180 = sbr.rel (%p178) target = $region36
        $region35: #{_apply_gain_2d.1} parent=27 // pred_region
          %s181 = smul.u32 2, %s20
          %s183 = ssub.s32 256, 256
          %184 = vsyncadd %s174, %s183
          %s185 = smul.addr %s181, 128
          %s186 = scalar_lea.hbm %s2, %s185
          %s187 = sshll.u32 %s177, 4
          %s188 = int_to_ptr.vmem [resolvable:$true] %s187
          %193 = dma.vmem_to_hbm [thread:$0]  %s188, 256, %s186, %s174, 128, 128, 8
        $region36: #{_apply_gain_2d.1} parent=27 // pred_fallthru
          _
      $region28: #{_apply_gain_2d.1} parent=5 // pred_fallthru
        _
      %p194 = scmp.le.s32.totalorder 2, %s15
      // Predicated region
      $region37: #{_apply_gain_2d.1} parent=5 // pred_check
        %p195 = pneg %p194
      $region38: #{_apply_gain_2d.1} parent=5 // pred_check_branch
        %197 = sbr.rel (%p195) target = $region40
      $region39: #{_apply_gain_2d.1} parent=5 // pred_region
        %s198 = ssub.s32 %s15, 2
        // Predicated region
        $region41: #{_apply_gain_2d.1} parent=39 // pred_check
          %p199 = pneg %p91
        $region42: #{_apply_gain_2d.1} parent=39 // pred_check_branch
          %201 = sbr.rel (%p199) target = $region44
        $region43: #{_apply_gain_2d.1} parent=39 // pred_region
          %s202 = sand.u32 %s76, 1
          %s203 = scalar_lea.sflag [#allocation5], %s202
          %s204 = sand.u32 %s76, 1
          %s205 = smul.addr %s204, 16
          %s206 = scalar_lea.vmem [#allocation6], %s205
          %207 = dma.done %s203, 256
        $region44: #{_apply_gain_2d.1} parent=39 // pred_fallthru
          _
      $region40: #{_apply_gain_2d.1} parent=5 // pred_fallthru
        _
    $region6: #{_apply_gain_2d.1} parent=1 // loop_footer
      %s19 = sadd.s32 1, %s15
    $region7: #{_apply_gain_2d.1} parent=1 // loop_footer_branch
      %14 = sbr.rel target = $region3
    $region8: #{_apply_gain_2d.1} parent=1 // loop_exit
      _
    %208 = vsyncpa [#allocation4], 1
    %s209 = scalar_lea.sflag [#allocation4], 1
    %210 = vsyncpa %s209, 1
    %211 = vsyncpa [#allocation5], 1
    %s212 = scalar_lea.sflag [#allocation5], 1
    %213 = vsyncpa %s212, 1

</llo_original>
